<compile_context>
chip_gen: v7x
topology: tpu7x:2x2x1
jax: 0.10.0
libtpu: 0.0.40
codegen_flags: <defaults>
</compile_context>

<pallas_src>
import functools

import jax
import jax.numpy as jnp
from jax.experimental import pallas as pl
from jax.experimental.pallas import tpu as pltpu

_TN = 128            # max x-points per tile (sublane axis)
_TM = 4096           # max y-points per tile (lane axis), multiple of 128
_LANES = 128
_BIG = 1e30          # running-min init (finite -> sqrt-safe)
_SENTINEL = 1e6      # padding coordinate: far from any real point


def _chamfer_kernel(x_ref, y_ref, d1_ref, d2_ref, acc_ref, *, ch):
    # x_ref  : (1, tn, 8)      augmented x tile  [-2x, 1, ||x||^2, 0,0,0]
    # y_ref  : (1, 8, tm)      augmented y tile  [y; ||y||^2; 1; 0;0;0]
    # d1_ref : (1, 1, tn)      per-n-tile output, resident across the m axis
    # d2_ref : (1, Mt, tm)     full per-batch output, resident across (n, m)
    # acc_ref: (tn, 128) f32   two-stage running min for d1
    n = pl.program_id(1)
    m = pl.program_id(2)
    num_n = pl.num_programs(1)
    num_m = pl.num_programs(2)

    tm = y_ref.shape[2]

    @pl.when(jnp.logical_and(n == 0, m == 0))
    def _init_d2():
        d2_ref[...] = jnp.full(d2_ref.shape, _BIG, jnp.float32)

    @pl.when(m == 0)
    def _init_acc():
        acc_ref[...] = jnp.full(acc_ref.shape, _BIG, jnp.float32)

    x_aug = x_ref[0]                                  # (tn, 8)
    run = acc_ref[...]                                # (tn, 128)
    col_chunks = []

    for g in range(tm // ch):
        lo = g * ch
        y_chunk = y_ref[0, :, lo:lo + ch]             # (8, ch) lane-dense
        # Full squared distance on the MXU: -2xy + ||y||^2 + ||x||^2.
        dsq = jnp.dot(x_aug, y_chunk,
                      preferred_element_type=jnp.float32,
                      precision=jax.lax.Precision.HIGHEST)   # (tn, ch)

        # d1: element-wise VPU fold across 128-lane slices; XLU reduce deferred.
        for s in range(ch // _LANES):
            run = jnp.minimum(run, dsq[:, s * _LANES:(s + 1) * _LANES])

        # d2: min over this n-tile's points (cheap sublane reduce per chunk).
        col_chunks.append(jnp.min(dsq, axis=0, keepdims=True))   # (1, ch)

    acc_ref[...] = run

    # Single lane-dense RMW of the resident d2 row for m-tile `m`.
    col_min = jnp.concatenate(col_chunks, axis=1)                 # (1, tm)
    cur = d2_ref[0, pl.ds(m, 1), :]                               # (1, tm)
    d2_ref[0, pl.ds(m, 1), :] = jnp.minimum(cur, col_min)

    @pl.when(m == num_m - 1)
    def _finalize_d1():
        # One cross-lane min per n tile: XLU transpose + sublane reduce,
        # result already lane-major for the store.  Clamp before sqrt.
        acc_t = jnp.transpose(acc_ref[...])                       # (128, tn)
        d1_ref[0, 0, :] = jnp.sqrt(jnp.maximum(jnp.min(acc_t, axis=0), 0.0))

    @pl.when(jnp.logical_and(n == num_n - 1, m == num_m - 1))
    def _finalize_d2():
        d2_ref[...] = jnp.sqrt(jnp.maximum(d2_ref[...], 0.0))


def _round_up(x, mult):
    return ((x + mult - 1) // mult) * mult


def _chamfer_pallas(xyz1, xyz2, *, tn_max=_TN, tm_max=_TM):
    """Per-point nearest-neighbour L2 distances (already sqrt'ed).

    xyz1: (B, N, 3), xyz2: (B, M, 3).  Returns (dist1 (B, N), dist2 (B, M)).
    """
    B, N, C = xyz1.shape
    B2, M, C2 = xyz2.shape
    assert C == 3 and C2 == 3 and B == B2

    # Adaptive tile sizes (respect the (8,128)/full-dim BlockSpec rules).
    tn = min(tn_max, _round_up(N, 8))
    tm = min(tm_max, _round_up(M, _LANES))
    n_pad = _round_up(N, tn)
    m_pad = _round_up(M, tm)
    n_tiles = n_pad // tn
    m_tiles = m_pad // tm

    # MXU chunk width along the lane axis (bounds register/VMEM pressure).
    ch = 256 if tm % 256 == 0 else _LANES

    x = jnp.pad(xyz1.astype(jnp.float32), ((0, 0), (0, n_pad - N), (0, 0)),
                constant_values=_SENTINEL)
    y = jnp.pad(xyz2.astype(jnp.float32), ((0, 0), (0, m_pad - M), (0, 0)),
                constant_values=_SENTINEL)

    # Augmented operands: x_aug @ y_aug = ||x - y||^2 in a single MXU matmul.
    xnorm = jnp.sum(x * x, axis=-1, keepdims=True)                # (B, n_pad, 1)
    x_aug = jnp.concatenate(
        [-2.0 * x, jnp.ones_like(xnorm), xnorm,
         jnp.zeros((B, n_pad, 3), jnp.float32)], axis=-1)          # (B, n_pad, 8)

    y_t = jnp.transpose(y, (0, 2, 1))                              # (B, 3, m_pad)
    ynorm = jnp.sum(y * y, axis=-1)[:, None, :]                    # (B, 1, m_pad)
    y_aug = jnp.concatenate(
        [y_t, ynorm, jnp.ones_like(ynorm),
         jnp.zeros((B, 3, m_pad), jnp.float32)], axis=1)           # (B, 8, m_pad)

    grid_spec = pltpu.PrefetchScalarGridSpec(
        num_scalar_prefetch=0,
        grid=(B, n_tiles, m_tiles),
        in_specs=[
            pl.BlockSpec((1, tn, 8), lambda b, n, m: (b, n, 0)),
            pl.BlockSpec((1, 8, tm), lambda b, n, m: (b, 0, m)),
        ],
        out_specs=[
            pl.BlockSpec((1, 1, tn), lambda b, n, m: (b, 0, n)),
            pl.BlockSpec((1, m_tiles, tm), lambda b, n, m: (b, 0, 0)),
        ],
        scratch_shapes=[pltpu.VMEM((tn, _LANES), jnp.float32)],
    )

    # VMEM budget: resident d2 block + double-buffered inputs + headroom.
    d2_block_bytes = m_tiles * tm * 4
    y_block_bytes = 8 * tm * 4
    vmem_limit = max(32 * 1024 * 1024,
                     min(96 * 1024 * 1024,
                         4 * d2_block_bytes + 4 * y_block_bytes + 8 * 1024 * 1024))

    d1, d2 = pl.pallas_call(
        functools.partial(_chamfer_kernel, ch=ch),
        out_shape=(
            jax.ShapeDtypeStruct((B, 1, n_pad), jnp.float32),
            jax.ShapeDtypeStruct((B, m_tiles, tm), jnp.float32),
        ),
        grid_spec=grid_spec,
        compiler_params=pltpu.CompilerParams(
            dimension_semantics=("parallel", "arbitrary", "arbitrary"),
            vmem_limit_bytes=vmem_limit,
        ),
    )(x_aug, y_aug)

    dist1 = d1[:, 0, :N]
    dist2 = d2.reshape(B, m_pad)[:, :M]
    return dist1, dist2


def chamfer_distance_l1(xyz1, xyz2, ignore_zeros=False):
    """Equivalent of ChamferDistanceL1.forward (returns a scalar)."""
    batch_size = xyz1.shape[0]
    if batch_size == 1 and ignore_zeros:
        # TODO(synk): data-dependent boolean filtering only works eagerly
        # (not under jit), matching the PyTorch batch_size==1 behaviour.
        nz1 = jnp.sum(xyz1, axis=2)[0] != 0
        nz2 = jnp.sum(xyz2, axis=2)[0] != 0
        xyz1 = xyz1[0][nz1][None, ...]
        xyz2 = xyz2[0][nz2][None, ...]

    dist1, dist2 = _chamfer_pallas(xyz1, xyz2)        # sqrt'ed in-kernel
    return (jnp.mean(dist1) + jnp.mean(dist2)) / 2.0


def _reference_loss(xyz1, xyz2):
    diff = xyz1[:, :, None, :] - xyz2[:, None, :, :]
    d = jnp.sum(diff * diff, axis=-1)
    return (jnp.mean(jnp.sqrt(jnp.min(d, axis=2)))
            + jnp.mean(jnp.sqrt(jnp.min(d, axis=1)))) / 2.0


if __name__ == "__main__":
    key = jax.random.PRNGKey(0)
    k1, k2, k3, k4 = jax.random.split(key, 4)

    # Small case (matches the module's typical tiny point clouds).
    B, N, M = 2, 16, 24
    xyz1 = jax.random.normal(k1, (B, N, 3), dtype=jnp.float32)
    xyz2 = jax.random.normal(k2, (B, M, 3), dtype=jnp.float32)
    loss = chamfer_distance_l1(xyz1, xyz2)
    jax.block_until_ready(loss)
    ref = _reference_loss(xyz1, xyz2)
    assert jnp.allclose(loss, ref, atol=1e-4, rtol=1e-4), (loss, ref)

    # Multi-tile case (exercises n-tiling, m-tiling, padding, accumulators,
    # the lane-dense d2 RMW across m tiles and the MXU chunk loop).
    B2, N2, M2 = 2, 300, 4100
    xyz1b = jax.random.normal(k3, (B2, N2, 3), dtype=jnp.float32)
    xyz2b = jax.random.normal(k4, (B2, M2, 3), dtype=jnp.float32)
    loss2 = chamfer_distance_l1(xyz1b, xyz2b)
    jax.block_until_ready(loss2)
    ref2 = _reference_loss(xyz1b, xyz2b)
    assert jnp.allclose(loss2, ref2, atol=1e-4, rtol=1e-4), (loss2, ref2)

    print("KERNEL_OK")
</pallas_src>

<mosaic_0001>
module attributes {stable_mosaic.version = 11 : i64} {
  func.func @_chamfer_kernel(%arg0: i32, %arg1: i32, %arg2: i32, %arg3: memref<1x16x8xf32, #tpu.memory_space<vmem>>, %arg4: memref<1x8x128xf32, #tpu.memory_space<vmem>>, %arg5: memref<1x1x16xf32, #tpu.memory_space<vmem>>, %arg6: memref<1x1x128xf32, #tpu.memory_space<vmem>>, %arg7: memref<16x128xf32, #tpu.memory_space<vmem>>) attributes {dimension_semantics = [#tpu.dimension_semantics<parallel>, #tpu.dimension_semantics<arbitrary>, #tpu.dimension_semantics<arbitrary>], iteration_bounds = array<i64: 2, 1, 1>, scalar_prefetch = 0 : i64, scratch_operands = 1 : i64, tpu.core_type = #tpu.core_type<tc>, window_params = [{transform_indices = @transform_0, window_bounds = array<i64: 1, 16, 8>}, {transform_indices = @transform_1, window_bounds = array<i64: 1, 8, 128>}, {transform_indices = @transform_2, window_bounds = array<i64: 1, 1, 16>}, {transform_indices = @transform_3, window_bounds = array<i64: 1, 1, 128>}]} {
    %c0_i32 = arith.constant 0 : i32
    %0 = arith.cmpi eq, %arg1, %c0_i32 : i32
    %c0_i32_0 = arith.constant 0 : i32
    %1 = arith.cmpi eq, %arg2, %c0_i32_0 : i32
    %2 = arith.andi %0, %1 : i1
    %3 = arith.extui %2 : i1 to i32
    %c0_i32_1 = arith.constant 0 : i32
    %4 = arith.cmpi ne, %3, %c0_i32_1 : i32
    scf.if %4 {
      %cst_23 = arith.constant 1.000000e+30 : f32
      %34 = vector.broadcast %cst_23 : f32 to vector<1x1x128xf32>
      %c0_24 = arith.constant 0 : index
      %c0_25 = arith.constant 0 : index
      %c0_26 = arith.constant 0 : index
      %35 = vector.load %arg6[%c0_24, %c0_25, %c0_26] : memref<1x1x128xf32, #tpu.memory_space<vmem>>, vector<1x1x128xf32>
      tpu.vector_store %arg6[%c0_24, %c0_25, %c0_26], %34 {strides = array<i32>} : memref<1x1x128xf32, #tpu.memory_space<vmem>>, vector<1x1x128xf32>,
    } else {
    }
    %c0_i32_2 = arith.constant 0 : i32
    %5 = arith.cmpi eq, %arg2, %c0_i32_2 : i32
    %6 = arith.extui %5 : i1 to i32
    %c0_i32_3 = arith.constant 0 : i32
    %7 = arith.cmpi ne, %6, %c0_i32_3 : i32
    scf.if %7 {
      %cst_23 = arith.constant 1.000000e+30 : f32
      %34 = vector.broadcast %cst_23 : f32 to vector<16x128xf32>
      %c0_24 = arith.constant 0 : index
      %c0_25 = arith.constant 0 : index
      %35 = vector.load %arg7[%c0_24, %c0_25] : memref<16x128xf32, #tpu.memory_space<vmem>>, vector<16x128xf32>
      tpu.vector_store %arg7[%c0_24, %c0_25], %34 {strides = array<i32>} : memref<16x128xf32, #tpu.memory_space<vmem>>, vector<16x128xf32>,
    } else {
    }
    %c0 = arith.constant 0 : index
    %c0_4 = arith.constant 0 : index
    %c0_5 = arith.constant 0 : index
    %8 = vector.load %arg3[%c0, %c0_4, %c0_5] : memref<1x16x8xf32, #tpu.memory_space<vmem>>, vector<1x16x8xf32>
    %9 = vector.shape_cast %8 : vector<1x16x8xf32> to vector<16x8xf32>
    %c0_6 = arith.constant 0 : index
    %c0_7 = arith.constant 0 : index
    %10 = vector.load %arg7[%c0_6, %c0_7] : memref<16x128xf32, #tpu.memory_space<vmem>>, vector<16x128xf32>
    %c0_8 = arith.constant 0 : index
    %c0_9 = arith.constant 0 : index
    %c0_10 = arith.constant 0 : index
    %11 = vector.load %arg4[%c0_8, %c0_9, %c0_10] : memref<1x8x128xf32, #tpu.memory_space<vmem>>, vector<1x8x128xf32>
    %12 = vector.shape_cast %11 : vector<1x8x128xf32> to vector<8x128xf32>
    %cst = arith.constant dense<0.000000e+00> : vector<16x128xf32>
    %13 = tpu.matmul %9, %12, %cst {dimension_numbers = #tpu.dot_dimension_numbers<[1], [0], [0], [1], [0, 0, 1, 1], [], []>, precision = #tpu.contract_precision<fp32>} : vector<16x8xf32>, vector<8x128xf32>, vector<16x128xf32> -> vector<16x128xf32>
    %14 = arith.minimumf %10, %13 : vector<16x128xf32>
    %cst_11 = arith.constant dense<0x7F800000> : vector<128xf32>
    %15 = vector.multi_reduction <minimumf>, %13, %cst_11 [0] : vector<16x128xf32> to vector<128xf32>
    %16 = vector.shape_cast %15 : vector<128xf32> to vector<1x128xf32>
    %c0_12 = arith.constant 0 : index
    %c0_13 = arith.constant 0 : index
    %17 = vector.load %arg7[%c0_12, %c0_13] : memref<16x128xf32, #tpu.memory_space<vmem>>, vector<16x128xf32>
    tpu.vector_store %arg7[%c0_12, %c0_13], %14 {strides = array<i32>} : memref<16x128xf32, #tpu.memory_space<vmem>>, vector<16x128xf32>,
    %c0_14 = arith.constant 0 : index
    %18 = arith.index_cast %arg2 : i32 to index
    %c0_15 = arith.constant 0 : index
    %19 = vector.load %arg6[%c0_14, %18, %c0_15] : memref<1x1x128xf32, #tpu.memory_space<vmem>>, vector<1x1x128xf32>
    %20 = vector.shape_cast %19 : vector<1x1x128xf32> to vector<1x128xf32>
    %21 = arith.minimumf %20, %16 : vector<1x128xf32>
    %c0_16 = arith.constant 0 : index
    %22 = arith.index_cast %arg2 : i32 to index
    %c0_17 = arith.constant 0 : index
    %23 = vector.load %arg6[%c0_16, %22, %c0_17] : memref<1x1x128xf32, #tpu.memory_space<vmem>>, vector<1x1x128xf32>
    %24 = vector.shape_cast %23 : vector<1x1x128xf32> to vector<1x128xf32>
    %25 = vector.shape_cast %21 : vector<1x128xf32> to vector<1x1x128xf32>
    tpu.vector_store %arg6[%c0_16, %22, %c0_17], %25 {strides = array<i32>} : memref<1x1x128xf32, #tpu.memory_space<vmem>>, vector<1x1x128xf32>,
    %c0_i32_18 = arith.constant 0 : i32
    %26 = arith.cmpi eq, %arg2, %c0_i32_18 : i32
    %27 = arith.extui %26 : i1 to i32
    %c0_i32_19 = arith.constant 0 : i32
    %28 = arith.cmpi ne, %27, %c0_i32_19 : i32
    scf.if %28 {
      %c0_23 = arith.constant 0 : index
      %c0_24 = arith.constant 0 : index
      %34 = vector.load %arg7[%c0_23, %c0_24] : memref<16x128xf32, #tpu.memory_space<vmem>>, vector<16x128xf32>
      %35 = tpu.transpose %34, [1, 0] : vector<16x128xf32> -> vector<128x16xf32>
      %cst_25 = arith.constant dense<0x7F800000> : vector<16xf32>
      %36 = vector.multi_reduction <minimumf>, %35, %cst_25 [0] : vector<128x16xf32> to vector<16xf32>
      %cst_26 = arith.constant 0.000000e+00 : f32
      %37 = vector.broadcast %cst_26 : f32 to vector<16xf32>
      %38 = arith.maximumf %36, %37 : vector<16xf32>
      %39 = math.sqrt %38 : vector<16xf32>
      %c0_27 = arith.constant 0 : index
      %c0_28 = arith.constant 0 : index
      %c0_29 = arith.constant 0 : index
      %40 = vector.load %arg5[%c0_27, %c0_28, %c0_29] : memref<1x1x16xf32, #tpu.memory_space<vmem>>, vector<1x1x16xf32>
      %41 = vector.shape_cast %40 : vector<1x1x16xf32> to vector<16xf32>
      %42 = vector.shape_cast %39 : vector<16xf32> to vector<1x1x16xf32>
      tpu.vector_store %arg5[%c0_27, %c0_28, %c0_29], %42 {strides = array<i32>} : memref<1x1x16xf32, #tpu.memory_space<vmem>>, vector<1x1x16xf32>,
    } else {
    }
    %c0_i32_20 = arith.constant 0 : i32
    %29 = arith.cmpi eq, %arg1, %c0_i32_20 : i32
    %c0_i32_21 = arith.constant 0 : i32
    %30 = arith.cmpi eq, %arg2, %c0_i32_21 : i32
    %31 = arith.andi %29, %30 : i1
    %32 = arith.extui %31 : i1 to i32
    %c0_i32_22 = arith.constant 0 : i32
    %33 = arith.cmpi ne, %32, %c0_i32_22 : i32
    scf.if %33 {
      %c0_23 = arith.constant 0 : index
      %c0_24 = arith.constant 0 : index
      %c0_25 = arith.constant 0 : index
      %34 = vector.load %arg6[%c0_23, %c0_24, %c0_25] : memref<1x1x128xf32, #tpu.memory_space<vmem>>, vector<1x1x128xf32>
      %cst_26 = arith.constant 0.000000e+00 : f32
      %35 = vector.broadcast %cst_26 : f32 to vector<1x1x128xf32>
      %36 = arith.maximumf %34, %35 : vector<1x1x128xf32>
      %37 = math.sqrt %36 : vector<1x1x128xf32>
      %c0_27 = arith.constant 0 : index
      %c0_28 = arith.constant 0 : index
      %c0_29 = arith.constant 0 : index
      %38 = vector.load %arg6[%c0_27, %c0_28, %c0_29] : memref<1x1x128xf32, #tpu.memory_space<vmem>>, vector<1x1x128xf32>
      tpu.vector_store %arg6[%c0_27, %c0_28, %c0_29], %37 {strides = array<i32>} : memref<1x1x128xf32, #tpu.memory_space<vmem>>, vector<1x1x128xf32>,
    } else {
    }
    return
  }
  func.func @transform_0(%arg0: i32, %arg1: i32, %arg2: i32) -> (i32, i32, i32) {
    %c0_i32 = arith.constant 0 : i32
    %c0_i32_0 = arith.constant 0 : i32
    return %arg0, %arg1, %c0_i32 : i32, i32, i32
  }
  func.func @transform_1(%arg0: i32, %arg1: i32, %arg2: i32) -> (i32, i32, i32) {
    %c0_i32 = arith.constant 0 : i32
    %c0_i32_0 = arith.constant 0 : i32
    return %arg0, %c0_i32, %arg2 : i32, i32, i32
  }
  func.func @transform_2(%arg0: i32, %arg1: i32, %arg2: i32) -> (i32, i32, i32) {
    %c0_i32 = arith.constant 0 : i32
    %c0_i32_0 = arith.constant 0 : i32
    return %arg0, %c0_i32, %arg1 : i32, i32, i32
  }
  func.func @transform_3(%arg0: i32, %arg1: i32, %arg2: i32) -> (i32, i32, i32) {
    %c0_i32 = arith.constant 0 : i32
    %c0_i32_0 = arith.constant 0 : i32
    %c0_i32_1 = arith.constant 0 : i32
    return %arg0, %c0_i32, %c0_i32_0 : i32, i32, i32
  }
}

</mosaic_0001>

<llo_original>
// kernel: tpu_custom_call.1
$region0: #{tpu_custom_call.1}
  #allocation0 [shape = 'u32[]', space=smem, size = 0x4, offset = 0x4, fixed_abs, tag = 'smem constant byte address 0x4 - core index']
  #allocation1 [shape = 'u32[144,128]{1,0:T(1,128)}', space=vmem, size = 0x12000, scoped, tag = 'internal scratch']
  #allocation2 [shape = 'f32[16,128]{1,0:T(8,128)}', space=vmem, size = 0x2000, scoped, tag = 'scratch operand']
  %s0 = inlined_call_operand.vmem [shape: f32[2,16,8], index: 0, kind: input, shape index: {}]
  %s1 = inlined_call_operand.vmem [shape: f32[2,8,128], index: 1, kind: input, shape index: {}]
  %s2 = inlined_call_operand.hbm [shape: f32[2,1,16], index: 2, kind: output, shape index: {0}]
  %s3 = inlined_call_operand.hbm [shape: f32[2,1,128], index: 3, kind: output, shape index: {1}]
  %4 = xla_tuple %s2, %s3
  %s5 = sld [smem:[#allocation0]]
  $region65: #{tpu_custom_call.1} parent=0
    _
  %s7 = ssub.s32 1, %s5
  %s8 = scalar_select 0, %s7, %s5
  $region1: #{tpu_custom_call.1} parent=0
    #allocation3 [shape = 'u8[1024]{0}', space=vmem, size = 0x400, scoped, tag = 'output window, operand 0']
    #allocation4 [shape = 's32[2]{0}', space=sflag, size = 0x8, scoped, tag = 'scoped memory for tpu_custom_call.1']
    #allocation5 [shape = 'u8[1024]{0}', space=vmem, size = 0x400, scoped, tag = 'output window, operand 1']
    #allocation6 [shape = 's32[2]{0}', space=sflag, size = 0x8, scoped, tag = 'scoped memory for tpu_custom_call.1']
    %9 = vsyncpa [#allocation4], 0
    %s10 = scalar_lea.sflag [#allocation4], 1
    %11 = vsyncpa %s10, 0
    %12 = vsyncpa [#allocation6], 0
    %s13 = scalar_lea.sflag [#allocation6], 1
    %14 = vsyncpa %s13, 0
    loop: start=0, step=1, limit=4
    $region2: #{tpu_custom_call.1} parent=1 // loop_pre_header
      _
    $region3: #{tpu_custom_call.1} parent=1 // loop_header
      %s16 = sphi 0, %s20
      %p17 = scmp.ge.s32.totalorder %s16, 4
      %s23 = sphi 0, %s42
      %s24 = sphi 0, %s38
      %s25 = sphi 0, %s34
      %s26 = sphi 0, %s23
      %s27 = sphi 0, %s24
      %s28 = sphi 0, %s25
      %s29 = sphi 0, %s26
      %s30 = sphi 0, %s27
      %s31 = sphi 0, %s28
      %s47 = sphi 0, %s49
      %s50 = sphi 0, %s47
      %s51 = sphi 0, %s50
      %s67 = sphi 0, %s51
      %s75 = sphi 0, %s77
      %s78 = sphi 0, %s75
      %s79 = sphi 0, %s78
      %s95 = sphi 0, %s79
      %s103 = sphi 0, %s105
      %s106 = sphi 0, %s103
      %s107 = sphi 0, %s106
      %s123 = sphi 0, %s107
      %s129 = sphi 0, %s131
      %s132 = sphi 0, %s129
      %s133 = sphi 0, %s132
      %s149 = sphi 0, %s133
    $region4: #{tpu_custom_call.1} parent=1 // loop_header_branch
      %19 = sbr.rel (%p17) target = $region8
    $region5: #{tpu_custom_call.1} parent=1 // loop_body
      %s21 = ssub.s32 %s16, 1
      %s22 = ssub.s32 %s16, 2
      %s32 = sadd.s32 1, %s25
      %p33 = scmp.ge.s32.totalorder %s32, 1
      %s34 = scalar_select %p33, 0, %s32
      %s35 = sadd.s32 1, %s24
      %s36 = scalar_select %p33, %s35, %s24
      %p37 = scmp.ge.s32.totalorder %s36, 1
      %s38 = scalar_select %p37, 0, %s36
      %s39 = sadd.s32 1, %s23
      %s40 = scalar_select %p37, %s39, %s23
      %p41 = scmp.ge.s32.totalorder %s40, 2
      %s42 = scalar_select %p41, 0, %s40
      %s43 = ssub.s32 %s23, %s42
      %s44 = ssub.s32 %s24, %s38
      %s45 = sor.u32 %s43, %s44
      %p46 = scmp.eq.s32.totalorder %s45, 0
      %s48 = sadd.s32 %s47, 1
      %s49 = scalar_select %p46, %s47, %s48
      %p52 = pneg %p46
      %p53 = scmp.eq.s32.totalorder %s16, 1
      %p54 = por %p52, %p53
      %p55 = scmp.ne.s32.totalorder %s47, %s50
      %p56 = scmp.eq.s32.totalorder %s16, 0
      %p57 = por %p55, %p56
      %p58 = scmp.ne.s32.totalorder %s47, %s50
      %p59 = scmp.eq.s32.totalorder %s21, 1
      %p60 = por %p58, %p59
      %p61 = scmp.ne.s32.totalorder %s50, %s51
      %p62 = scmp.eq.s32.totalorder %s21, 0
      %p63 = por %p61, %p62
      %p64 = scmp.ne.s32.totalorder %s50, %s51
      %p65 = scmp.eq.s32.totalorder %s22, 1
      %p66 = por %p64, %p65
      %p68 = scmp.ne.s32.totalorder %s51, %s67
      %p69 = scmp.eq.s32.totalorder %s22, 0
      %p70 = por %p68, %p69
      %s71 = ssub.s32 %s23, %s42
      %s72 = ssub.s32 %s25, %s34
      %s73 = sor.u32 %s71, %s72
      %p74 = scmp.eq.s32.totalorder %s73, 0
      %s76 = sadd.s32 %s75, 1
      %s77 = scalar_select %p74, %s75, %s76
      %p80 = pneg %p74
      %p81 = scmp.eq.s32.totalorder %s16, 1
      %p82 = por %p80, %p81
      %p83 = scmp.ne.s32.totalorder %s75, %s78
      %p84 = scmp.eq.s32.totalorder %s16, 0
      %p85 = por %p83, %p84
      %p86 = scmp.ne.s32.totalorder %s75, %s78
      %p87 = scmp.eq.s32.totalorder %s21, 1
      %p88 = por %p86, %p87
      %p89 = scmp.ne.s32.totalorder %s78, %s79
      %p90 = scmp.eq.s32.totalorder %s21, 0
      %p91 = por %p89, %p90
      %p92 = scmp.ne.s32.totalorder %s78, %s79
      %p93 = scmp.eq.s32.totalorder %s22, 1
      %p94 = por %p92, %p93
      %p96 = scmp.ne.s32.totalorder %s79, %s95
      %p97 = scmp.eq.s32.totalorder %s22, 0
      %p98 = por %p96, %p97
      %s99 = ssub.s32 %s23, %s42
      %s100 = ssub.s32 %s24, %s38
      %s101 = sor.u32 %s99, %s100
      %p102 = scmp.eq.s32.totalorder %s101, 0
      %s104 = sadd.s32 %s103, 1
      %s105 = scalar_select %p102, %s103, %s104
      %p108 = pneg %p102
      %p109 = scmp.eq.s32.totalorder %s16, 1
      %p110 = por %p108, %p109
      %p111 = scmp.ne.s32.totalorder %s103, %s106
      %p112 = scmp.eq.s32.totalorder %s16, 0
      %p113 = por %p111, %p112
      %p114 = scmp.ne.s32.totalorder %s103, %s106
      %p115 = scmp.eq.s32.totalorder %s21, 1
      %p116 = por %p114, %p115
      %p117 = scmp.ne.s32.totalorder %s106, %s107
      %p118 = scmp.eq.s32.totalorder %s21, 0
      %p119 = por %p117, %p118
      %p120 = scmp.ne.s32.totalorder %s106, %s107
      %p121 = scmp.eq.s32.totalorder %s22, 1
      %p122 = por %p120, %p121
      %p124 = scmp.ne.s32.totalorder %s107, %s123
      %p125 = scmp.eq.s32.totalorder %s22, 0
      %p126 = por %p124, %p125
      %s127 = ssub.s32 %s23, %s42
      %p128 = scmp.eq.s32.totalorder %s127, 0
      %s130 = sadd.s32 %s129, 1
      %s131 = scalar_select %p128, %s129, %s130
      %p134 = pneg %p128
      %p135 = scmp.eq.s32.totalorder %s16, 1
      %p136 = por %p134, %p135
      %p137 = scmp.ne.s32.totalorder %s129, %s132
      %p138 = scmp.eq.s32.totalorder %s16, 0
      %p139 = por %p137, %p138
      %p140 = scmp.ne.s32.totalorder %s129, %s132
      %p141 = scmp.eq.s32.totalorder %s21, 1
      %p142 = por %p140, %p141
      %p143 = scmp.ne.s32.totalorder %s132, %s133
      %p144 = scmp.eq.s32.totalorder %s21, 0
      %p145 = por %p143, %p144
      %p146 = scmp.ne.s32.totalorder %s132, %s133
      %p147 = scmp.eq.s32.totalorder %s22, 1
      %p148 = por %p146, %p147
      %p150 = scmp.ne.s32.totalorder %s133, %s149
      %p151 = scmp.eq.s32.totalorder %s22, 0
      %p152 = por %p150, %p151
      %p153 = scmp.le.s32.totalorder 1, %s16
      %p154 = scmp.lt.s32.totalorder %s16, 3
      %p155 = pnand %p153, %p154
      %p156 = pneg %p155
      // Predicated region
      $region9: #{tpu_custom_call.1} parent=5 // pred_check
        _
      $region10: #{tpu_custom_call.1} parent=5 // pred_check_branch
        %158 = sbr.rel (%p155) target = $region12
      $region11: #{tpu_custom_call.1} parent=5 // pred_region
        %s159 = ssub.s32 %s16, 1
      $region12: #{tpu_custom_call.1} parent=5 // pred_fallthru
        _
      %p160 = scmp.lt.s32.totalorder %s16, 2
      // Predicated region
      $region13: #{tpu_custom_call.1} parent=5 // pred_check
        %p161 = pneg %p160
      $region14: #{tpu_custom_call.1} parent=5 // pred_check_branch
        %163 = sbr.rel (%p161) target = $region16
      $region15: #{tpu_custom_call.1} parent=5 // pred_region
        // Predicated region
        $region17: #{tpu_custom_call.1} parent=15 // pred_check
          %p164 = pneg %p57
        $region18: #{tpu_custom_call.1} parent=15 // pred_check_branch
          %166 = sbr.rel (%p164) target = $region20
        $region19: #{tpu_custom_call.1} parent=15 // pred_region
          %s167 = smul.u32 2, %s24
          %p168 = scmp.lt.s32.totalorder %s23, 1
          %s169 = scalar_select %p168, %s23, 1
          %p170 = scmp.lt.s32.totalorder %s167, 1
          %s171 = scalar_select %p170, %s167, 1
          %s172 = smul.addr %s169, 2
          %s173 = sadd.s32 %s171, %s172
          %s174 = smul.addr %s173, 8
          %s175 = scalar_lea.vmem %s0, %s174
          %s176 = smul.u32 2, %s24
        $region20: #{tpu_custom_call.1} parent=15 // pred_fallthru
          _
        // Predicated region
        $region21: #{tpu_custom_call.1} parent=15 // pred_check
          %p177 = pneg %p85
        $region22: #{tpu_custom_call.1} parent=15 // pred_check_branch
          %179 = sbr.rel (%p177) target = $region24
        $region23: #{tpu_custom_call.1} parent=15 // pred_region
          %p180 = scmp.lt.s32.totalorder %s23, 1
          %s181 = scalar_select %p180, %s23, 1
          %p182 = scmp.lt.s32.totalorder %s25, 0
          %s183 = scalar_select %p182, %s25, 0
          %s184 = sadd.s32 %s183, %s181
          %s185 = smul.addr %s184, 8
          %s186 = scalar_lea.vmem %s1, %s185
        $region24: #{tpu_custom_call.1} parent=15 // pred_fallthru
          _
      $region16: #{tpu_custom_call.1} parent=5 // pred_fallthru
        _
      %p187 = scmp.le.s32.totalorder 1, %s16
      %p188 = scmp.lt.s32.totalorder %s16, 3
      %p189 = pnand %p187, %p188
      %p190 = pneg %p189
      // Predicated region
      $region25: #{tpu_custom_call.1} parent=5 // pred_check
        _
      $region26: #{tpu_custom_call.1} parent=5 // pred_check_branch
        %192 = sbr.rel (%p189) target = $region28
      $region27: #{tpu_custom_call.1} parent=5 // pred_region
        %s193 = ssub.s32 %s16, 1
        %s194 = smul.u32 2, %s27
        %p195 = scmp.lt.s32.totalorder %s26, 1
        %s196 = scalar_select %p195, %s26, 1
        %p197 = scmp.lt.s32.totalorder %s194, 1
        %s198 = scalar_select %p197, %s194, 1
        %s199 = smul.addr %s196, 2
        %s200 = sadd.s32 %s198, %s199
        %s201 = smul.addr %s200, 8
        %s202 = scalar_lea.vmem %s0, %s201
        %p203 = pneg %p63
        %p204 = pneg %p60
        %p205 = scmp.lt.s32.totalorder %s26, 1
        %s206 = scalar_select %p205, %s26, 1
        %p207 = scmp.lt.s32.totalorder %s28, 0
        %s208 = scalar_select %p207, %s28, 0
        %s209 = sadd.s32 %s208, %s206
        %s210 = smul.addr %s209, 8
        %s211 = scalar_lea.vmem %s1, %s210
        %p212 = pneg %p91
        %p213 = pneg %p88
        %p214 = pneg %p119
        %p215 = pneg %p116
        %s216 = sand.u32 %s106, 1
        %s217 = scalar_lea.sflag [#allocation4], %s216
        %s218 = sand.u32 %s106, 1
        %s219 = scalar_lea.vmem [#allocation3], %s218
        %p220 = pneg %p145
        %p221 = pneg %p142
        %s222 = sand.u32 %s132, 1
        %s223 = scalar_lea.sflag [#allocation6], %s222
        %s224 = sand.u32 %s132, 1
        %s225 = scalar_lea.vmem [#allocation5], %s224
        %s226 = smul.u32 2, %s27
        %p227 = scmp.lt.s32.totalorder %s26, 1
        %s228 = scalar_select %p227, %s26, 1
        %p229 = scmp.lt.s32.totalorder %s226, 1
        %s230 = scalar_select %p229, %s226, 1
        %s231 = smul.addr %s228, 2
        %s232 = sadd.s32 %s230, %s231
        %s233 = smul.addr %s232, 8
        %s234 = scalar_lea.vmem %s0, %s233
        %s235 = smul.u32 2, %s27
        %p236 = scmp.lt.s32.totalorder %s26, 1
        %s237 = scalar_select %p236, %s26, 1
        %p238 = scmp.lt.s32.totalorder %s28, 0
        %s239 = scalar_select %p238, %s28, 0
        %s240 = sadd.s32 %s239, %s237
        %s241 = smul.addr %s240, 8
        %s242 = scalar_lea.vmem %s1, %s241
        %p243 = scmp.eq.s32.totalorder %s27, 0
        %p244 = scmp.eq.s32.totalorder %s28, 0
        %p245 = pnand %p243, %p244
        %p246 = pneg %p245
        // Predicated region
        $region29: #{tpu_custom_call.1} parent=27 // pred_check
          _
        $region30: #{tpu_custom_call.1} parent=27 // pred_check_branch
          %248 = sbr.rel (%p245) target = $region32
        $region31: #{tpu_custom_call.1} parent=27 // pred_region
          %249 = vst [vmem:[%s225] sm:$0x1] 1e+30
        $region32: #{tpu_custom_call.1} parent=27 // pred_fallthru
          _
        // Predicated region
        $region33: #{tpu_custom_call.1} parent=27 // pred_check
          %p250 = pneg %p244
        $region34: #{tpu_custom_call.1} parent=27 // pred_check_branch
          %252 = sbr.rel (%p250) target = $region36
        $region35: #{tpu_custom_call.1} parent=27 // pred_region
          %253 = vst [vmem:[#allocation2] sm:$0xff] 1e+30
          %254 = vst [vmem:[#allocation2 + $0x8] sm:$0xff] 1e+30
        $region36: #{tpu_custom_call.1} parent=27 // pred_fallthru
          _
        %v255 = vld [vmem:[%s234] sm:$0xff]
        %v256 = vld [vmem:[%s234 + $0x8] sm:$0xff]
        %v257 = vld [vmem:[#allocation2] sm:$0xff]
        %v258 = vld [vmem:[#allocation2 + $0x8] sm:$0xff]
        %v259 = vld [vmem:[%s242] sm:$0xff]
        %vm260 = vcmask 64512
        %v262 = vsel %vm260, %v255, 0
        %v265 = vsel %vm260, %v256, 0
        %267 = vmatprep.subr.mxu0 0.0
        %v268 = vand.u32 %v259, 4294901760
        %269 = vmatpush1.msra.mxu0 %v268
        %270 = vmatprep.subr.mxu0 0.0
        %271 = vmatpush1.msra.mxu0 0.0
        %272 = vmatprep.subr.mxu0 0.0
        %273 = vmatpush1.msra.mxu0 0.0
        %274 = vmatprep.subr.mxu0 0.0
        %275 = vmatpush1.msra.mxu0 0.0
        %276 = vmatprep.subr.mxu0 0.0
        %277 = vmatpush1.msra.mxu0 0.0
        %278 = vmatprep.subr.mxu0 0.0
        %279 = vmatpush1.msra.mxu0 0.0
        %280 = vmatprep.subr.mxu0 0.0
        %281 = vmatpush1.msra.mxu0 0.0
        %282 = vmatprep.subr.mxu0 0.0
        %283 = vmatpush1.msra.mxu0 0.0
        %284 = vmatprep.subr.mxu0 0.0
        %285 = vmatpush1.msra.mxu0 0.0
        %286 = vmatprep.subr.mxu0 0.0
        %287 = vmatpush1.msra.mxu0 0.0
        %288 = vmatprep.subr.mxu0 0.0
        %289 = vmatpush1.msra.mxu0 0.0
        %290 = vmatprep.subr.mxu0 0.0
        %291 = vmatpush1.msra.mxu0 0.0
        %292 = vmatprep.subr.mxu0 0.0
        %293 = vmatpush1.msra.mxu0 0.0
        %294 = vmatprep.subr.mxu0 0.0
        %295 = vmatpush1.msra.mxu0 0.0
        %296 = vmatprep.subr.mxu0 0.0
        %297 = vmatpush1.msra.mxu0 0.0
        %298 = vmatprep.subr.mxu0 0.0
        %299 = vmatpush1.msra.mxu0 0.0
        %300 = vmatprep.subr.mxu0 0.0
        %301 = vmatpush1.msra.mxu0 0.0
        %302 = vmatprep.subr.mxu0 0.0
        %303 = vmatpush1.msra.mxu0 0.0
        %304 = vmatprep.subr.mxu0 0.0
        %305 = vmatpush1.msra.mxu0 0.0
        %306 = vmatprep.subr.mxu0 0.0
        %307 = vmatpush1.msra.mxu0 0.0
        %308 = vmatprep.subr.mxu0 0.0
        %309 = vmatpush1.msra.mxu0 0.0
        %310 = vmatprep.subr.mxu0 0.0
        %311 = vmatpush1.msra.mxu0 0.0
        %312 = vmatprep.subr.mxu0 0.0
        %313 = vmatpush1.msra.mxu0 0.0
        %314 = vmatprep.subr.mxu0 0.0
        %315 = vmatpush1.msra.mxu0 0.0
        %316 = vmatprep.subr.mxu0 0.0
        %317 = vmatpush1.msra.mxu0 0.0
        %318 = vmatprep.subr.mxu0 0.0
        %319 = vmatpush1.msra.mxu0 0.0
        %320 = vmatprep.subr.mxu0 0.0
        %321 = vmatpush1.msra.mxu0 0.0
        %322 = vmatprep.subr.mxu0 0.0
        %323 = vmatpush1.msra.mxu0 0.0
        %324 = vmatprep.subr.mxu0 0.0
        %325 = vmatpush1.msra.mxu0 0.0
        %326 = vmatprep.subr.mxu0 0.0
        %327 = vmatpush1.msra.mxu0 0.0
        %328 = vmatprep.subr.mxu0 0.0
        %329 = vmatpush1.msra.mxu0 0.0
        %330 = vmatprep.subr.mxu0 0.0
        %331 = vmatpush1.msra.mxu0 0.0
        %332 = vmatprep.mubr.f32.mxu0 0.0
        %v333 = vand.u32 %v262, 4294901760
        %v334 = vsub.f32 %v262, %v333
        %v335 = vand.u32 %v334, 4294901760
        %v336 = vsub.f32 %v334, %v335
        %v337 = vand.u32 %v336, 4294901760
        %338 = vmatmul.mubr.f32.gmra.mrb[0].mxu0 %v337
        %v339 = vpop.f32.mrb[0].mxu0
        %v340 = vadd.f32 0.0, %v339
        %v341 = vpop.f32.mrb[0].mxu0
        %342 = vmatprep.mubr.f32.mxu0 0.0
        %v343 = vand.u32 %v265, 4294901760
        %v344 = vsub.f32 %v265, %v343
        %v345 = vand.u32 %v344, 4294901760
        %v346 = vsub.f32 %v344, %v345
        %v347 = vand.u32 %v346, 4294901760
        %348 = vmatmul.mubr.f32.gmra.mrb[0].mxu0 %v347
        %v349 = vpop.f32.mrb[0].mxu0
        %v350 = vadd.f32 0.0, %v349
        %v351 = vpop.f32.mrb[0].mxu0
        %352 = vdwg.mxu0
        %353 = vmatprep.subr.mxu0 0.0
        %v354 = vand.u32 %v259, 4294901760
        %v355 = vsub.f32 %v259, %v354
        %v356 = vand.u32 %v355, 4294901760
        %v357 = vsub.f32 %v355, %v356
        %v358 = vand.u32 %v357, 4294901760
        %359 = vmatpush1.msra.mxu0 %v358
        %360 = vmatprep.subr.mxu0 0.0
        %361 = vmatpush1.msra.mxu0 0.0
        %362 = vmatprep.subr.mxu0 0.0
        %363 = vmatpush1.msra.mxu0 0.0
        %364 = vmatprep.subr.mxu0 0.0
        %365 = vmatpush1.msra.mxu0 0.0
        %366 = vmatprep.subr.mxu0 0.0
        %367 = vmatpush1.msra.mxu0 0.0
        %368 = vmatprep.subr.mxu0 0.0
        %369 = vmatpush1.msra.mxu0 0.0
        %370 = vmatprep.subr.mxu0 0.0
        %371 = vmatpush1.msra.mxu0 0.0
        %372 = vmatprep.subr.mxu0 0.0
        %373 = vmatpush1.msra.mxu0 0.0
        %374 = vmatprep.subr.mxu0 0.0
        %375 = vmatpush1.msra.mxu0 0.0
        %376 = vmatprep.subr.mxu0 0.0
        %377 = vmatpush1.msra.mxu0 0.0
        %378 = vmatprep.subr.mxu0 0.0
        %379 = vmatpush1.msra.mxu0 0.0
        %380 = vmatprep.subr.mxu0 0.0
        %381 = vmatpush1.msra.mxu0 0.0
        %382 = vmatprep.subr.mxu0 0.0
        %383 = vmatpush1.msra.mxu0 0.0
        %384 = vmatprep.subr.mxu0 0.0
        %385 = vmatpush1.msra.mxu0 0.0
        %386 = vmatprep.subr.mxu0 0.0
        %387 = vmatpush1.msra.mxu0 0.0
        %388 = vmatprep.subr.mxu0 0.0
        %389 = vmatpush1.msra.mxu0 0.0
        %390 = vmatprep.subr.mxu0 0.0
        %391 = vmatpush1.msra.mxu0 0.0
        %392 = vmatprep.subr.mxu0 0.0
        %393 = vmatpush1.msra.mxu0 0.0
        %394 = vmatprep.subr.mxu0 0.0
        %395 = vmatpush1.msra.mxu0 0.0
        %396 = vmatprep.subr.mxu0 0.0
        %397 = vmatpush1.msra.mxu0 0.0
        %398 = vmatprep.subr.mxu0 0.0
        %399 = vmatpush1.msra.mxu0 0.0
        %400 = vmatprep.subr.mxu0 0.0
        %401 = vmatpush1.msra.mxu0 0.0
        %402 = vmatprep.subr.mxu0 0.0
        %403 = vmatpush1.msra.mxu0 0.0
        %404 = vmatprep.subr.mxu0 0.0
        %405 = vmatpush1.msra.mxu0 0.0
        %406 = vmatprep.subr.mxu0 0.0
        %407 = vmatpush1.msra.mxu0 0.0
        %408 = vmatprep.subr.mxu0 0.0
        %409 = vmatpush1.msra.mxu0 0.0
        %410 = vmatprep.subr.mxu0 0.0
        %411 = vmatpush1.msra.mxu0 0.0
        %412 = vmatprep.subr.mxu0 0.0
        %413 = vmatpush1.msra.mxu0 0.0
        %414 = vmatprep.subr.mxu0 0.0
        %415 = vmatpush1.msra.mxu0 0.0
        %416 = vmatprep.subr.mxu0 0.0
        %417 = vmatpush1.msra.mxu0 0.0
        %418 = vmatprep.subr.mxu0 0.0
        %419 = vmatpush1.msra.mxu0 0.0
        %420 = vmatprep.subr.mxu0 0.0
        %421 = vmatpush1.msra.mxu0 0.0
        %422 = vmatprep.mubr.f32.mxu0 0.0
        %v423 = vand.u32 %v262, 4294901760
        %424 = vmatmul.mubr.f32.gmra.mrb[0].mxu0 %v423
        %v425 = vpop.f32.mrb[0].mxu0
        %v426 = vadd.f32 %v340, %v425
        %v427 = vpop.f32.mrb[0].mxu0
        %428 = vmatprep.mubr.f32.mxu0 0.0
        %v429 = vand.u32 %v265, 4294901760
        %430 = vmatmul.mubr.f32.gmra.mrb[0].mxu0 %v429
        %v431 = vpop.f32.mrb[0].mxu0
        %v432 = vadd.f32 %v350, %v431
        %v433 = vpop.f32.mrb[0].mxu0
        %434 = vdwg.mxu0
        %435 = vmatprep.subr.mxu0 0.0
        %v436 = vand.u32 %v259, 4294901760
        %v437 = vsub.f32 %v259, %v436
        %438 = vmatpush1.msra.mxu0 %v437
        %439 = vmatprep.subr.mxu0 0.0
        %440 = vmatpush1.msra.mxu0 0.0
        %441 = vmatprep.subr.mxu0 0.0
        %442 = vmatpush1.msra.mxu0 0.0
        %443 = vmatprep.subr.mxu0 0.0
        %444 = vmatpush1.msra.mxu0 0.0
        %445 = vmatprep.subr.mxu0 0.0
        %446 = vmatpush1.msra.mxu0 0.0
        %447 = vmatprep.subr.mxu0 0.0
        %448 = vmatpush1.msra.mxu0 0.0
        %449 = vmatprep.subr.mxu0 0.0
        %450 = vmatpush1.msra.mxu0 0.0
        %451 = vmatprep.subr.mxu0 0.0
        %452 = vmatpush1.msra.mxu0 0.0
        %453 = vmatprep.subr.mxu0 0.0
        %454 = vmatpush1.msra.mxu0 0.0
        %455 = vmatprep.subr.mxu0 0.0
        %456 = vmatpush1.msra.mxu0 0.0
        %457 = vmatprep.subr.mxu0 0.0
        %458 = vmatpush1.msra.mxu0 0.0
        %459 = vmatprep.subr.mxu0 0.0
        %460 = vmatpush1.msra.mxu0 0.0
        %461 = vmatprep.subr.mxu0 0.0
        %462 = vmatpush1.msra.mxu0 0.0
        %463 = vmatprep.subr.mxu0 0.0
        %464 = vmatpush1.msra.mxu0 0.0
        %465 = vmatprep.subr.mxu0 0.0
        %466 = vmatpush1.msra.mxu0 0.0
        %467 = vmatprep.subr.mxu0 0.0
        %468 = vmatpush1.msra.mxu0 0.0
        %469 = vmatprep.subr.mxu0 0.0
        %470 = vmatpush1.msra.mxu0 0.0
        %471 = vmatprep.subr.mxu0 0.0
        %472 = vmatpush1.msra.mxu0 0.0
        %473 = vmatprep.subr.mxu0 0.0
        %474 = vmatpush1.msra.mxu0 0.0
        %475 = vmatprep.subr.mxu0 0.0
        %476 = vmatpush1.msra.mxu0 0.0
        %477 = vmatprep.subr.mxu0 0.0
        %478 = vmatpush1.msra.mxu0 0.0
        %479 = vmatprep.subr.mxu0 0.0
        %480 = vmatpush1.msra.mxu0 0.0
        %481 = vmatprep.subr.mxu0 0.0
        %482 = vmatpush1.msra.mxu0 0.0
        %483 = vmatprep.subr.mxu0 0.0
        %484 = vmatpush1.msra.mxu0 0.0
        %485 = vmatprep.subr.mxu0 0.0
        %486 = vmatpush1.msra.mxu0 0.0
        %487 = vmatprep.subr.mxu0 0.0
        %488 = vmatpush1.msra.mxu0 0.0
        %489 = vmatprep.subr.mxu0 0.0
        %490 = vmatpush1.msra.mxu0 0.0
        %491 = vmatprep.subr.mxu0 0.0
        %492 = vmatpush1.msra.mxu0 0.0
        %493 = vmatprep.subr.mxu0 0.0
        %494 = vmatpush1.msra.mxu0 0.0
        %495 = vmatprep.subr.mxu0 0.0
        %496 = vmatpush1.msra.mxu0 0.0
        %497 = vmatprep.subr.mxu0 0.0
        %498 = vmatpush1.msra.mxu0 0.0
        %499 = vmatprep.subr.mxu0 0.0
        %500 = vmatpush1.msra.mxu0 0.0
        %501 = vmatprep.mubr.f32.mxu0 0.0
        %v502 = vand.u32 %v262, 4294901760
        %v503 = vsub.f32 %v262, %v502
        %504 = vmatmul.mubr.f32.gmra.mrb[0].mxu0 %v503
        %v505 = vpop.f32.mrb[0].mxu0
        %v506 = vadd.f32 %v426, %v505
        %v507 = vpop.f32.mrb[0].mxu0
        %508 = vmatprep.mubr.f32.mxu0 0.0
        %v509 = vand.u32 %v265, 4294901760
        %v510 = vsub.f32 %v265, %v509
        %511 = vmatmul.mubr.f32.gmra.mrb[0].mxu0 %v510
        %v512 = vpop.f32.mrb[0].mxu0
        %v513 = vadd.f32 %v432, %v512
        %v514 = vpop.f32.mrb[0].mxu0
        %515 = vdwg.mxu0
        %516 = vmatprep.subr.mxu0 0.0
        %v517 = vand.u32 %v259, 4294901760
        %518 = vmatpush1.msra.mxu0 %v517
        %519 = vmatprep.subr.mxu0 0.0
        %520 = vmatpush1.msra.mxu0 0.0
        %521 = vmatprep.subr.mxu0 0.0
        %522 = vmatpush1.msra.mxu0 0.0
        %523 = vmatprep.subr.mxu0 0.0
        %524 = vmatpush1.msra.mxu0 0.0
        %525 = vmatprep.subr.mxu0 0.0
        %526 = vmatpush1.msra.mxu0 0.0
        %527 = vmatprep.subr.mxu0 0.0
        %528 = vmatpush1.msra.mxu0 0.0
        %529 = vmatprep.subr.mxu0 0.0
        %530 = vmatpush1.msra.mxu0 0.0
        %531 = vmatprep.subr.mxu0 0.0
        %532 = vmatpush1.msra.mxu0 0.0
        %533 = vmatprep.subr.mxu0 0.0
        %534 = vmatpush1.msra.mxu0 0.0
        %535 = vmatprep.subr.mxu0 0.0
        %536 = vmatpush1.msra.mxu0 0.0
        %537 = vmatprep.subr.mxu0 0.0
        %538 = vmatpush1.msra.mxu0 0.0
        %539 = vmatprep.subr.mxu0 0.0
        %540 = vmatpush1.msra.mxu0 0.0
        %541 = vmatprep.subr.mxu0 0.0
        %542 = vmatpush1.msra.mxu0 0.0
        %543 = vmatprep.subr.mxu0 0.0
        %544 = vmatpush1.msra.mxu0 0.0
        %545 = vmatprep.subr.mxu0 0.0
        %546 = vmatpush1.msra.mxu0 0.0
        %547 = vmatprep.subr.mxu0 0.0
        %548 = vmatpush1.msra.mxu0 0.0
        %549 = vmatprep.subr.mxu0 0.0
        %550 = vmatpush1.msra.mxu0 0.0
        %551 = vmatprep.subr.mxu0 0.0
        %552 = vmatpush1.msra.mxu0 0.0
        %553 = vmatprep.subr.mxu0 0.0
        %554 = vmatpush1.msra.mxu0 0.0
        %555 = vmatprep.subr.mxu0 0.0
        %556 = vmatpush1.msra.mxu0 0.0
        %557 = vmatprep.subr.mxu0 0.0
        %558 = vmatpush1.msra.mxu0 0.0
        %559 = vmatprep.subr.mxu0 0.0
        %560 = vmatpush1.msra.mxu0 0.0
        %561 = vmatprep.subr.mxu0 0.0
        %562 = vmatpush1.msra.mxu0 0.0
        %563 = vmatprep.subr.mxu0 0.0
        %564 = vmatpush1.msra.mxu0 0.0
        %565 = vmatprep.subr.mxu0 0.0
        %566 = vmatpush1.msra.mxu0 0.0
        %567 = vmatprep.subr.mxu0 0.0
        %568 = vmatpush1.msra.mxu0 0.0
        %569 = vmatprep.subr.mxu0 0.0
        %570 = vmatpush1.msra.mxu0 0.0
        %571 = vmatprep.subr.mxu0 0.0
        %572 = vmatpush1.msra.mxu0 0.0
        %573 = vmatprep.subr.mxu0 0.0
        %574 = vmatpush1.msra.mxu0 0.0
        %575 = vmatprep.subr.mxu0 0.0
        %576 = vmatpush1.msra.mxu0 0.0
        %577 = vmatprep.subr.mxu0 0.0
        %578 = vmatpush1.msra.mxu0 0.0
        %579 = vmatprep.subr.mxu0 0.0
        %580 = vmatpush1.msra.mxu0 0.0
        %581 = vmatprep.mubr.f32.mxu0 0.0
        %v582 = vand.u32 %v262, 4294901760
        %v583 = vsub.f32 %v262, %v582
        %v584 = vand.u32 %v583, 4294901760
        %585 = vmatmul.mubr.f32.gmra.mrb[0].mxu0 %v584
        %v586 = vpop.f32.mrb[0].mxu0
        %v587 = vadd.f32 %v506, %v586
        %v588 = vpop.f32.mrb[0].mxu0
        %589 = vmatprep.mubr.f32.mxu0 0.0
        %v590 = vand.u32 %v265, 4294901760
        %v591 = vsub.f32 %v265, %v590
        %v592 = vand.u32 %v591, 4294901760
        %593 = vmatmul.mubr.f32.gmra.mrb[0].mxu0 %v592
        %v594 = vpop.f32.mrb[0].mxu0
        %v595 = vadd.f32 %v513, %v594
        %v596 = vpop.f32.mrb[0].mxu0
        %597 = vdwg.mxu0
        %598 = vmatprep.subr.mxu0 0.0
        %v599 = vand.u32 %v259, 4294901760
        %v600 = vsub.f32 %v259, %v599
        %v601 = vand.u32 %v600, 4294901760
        %602 = vmatpush1.msra.mxu0 %v601
        %603 = vmatprep.subr.mxu0 0.0
        %604 = vmatpush1.msra.mxu0 0.0
        %605 = vmatprep.subr.mxu0 0.0
        %606 = vmatpush1.msra.mxu0 0.0
        %607 = vmatprep.subr.mxu0 0.0
        %608 = vmatpush1.msra.mxu0 0.0
        %609 = vmatprep.subr.mxu0 0.0
        %610 = vmatpush1.msra.mxu0 0.0
        %611 = vmatprep.subr.mxu0 0.0
        %612 = vmatpush1.msra.mxu0 0.0
        %613 = vmatprep.subr.mxu0 0.0
        %614 = vmatpush1.msra.mxu0 0.0
        %615 = vmatprep.subr.mxu0 0.0
        %616 = vmatpush1.msra.mxu0 0.0
        %617 = vmatprep.subr.mxu0 0.0
        %618 = vmatpush1.msra.mxu0 0.0
        %619 = vmatprep.subr.mxu0 0.0
        %620 = vmatpush1.msra.mxu0 0.0
        %621 = vmatprep.subr.mxu0 0.0
        %622 = vmatpush1.msra.mxu0 0.0
        %623 = vmatprep.subr.mxu0 0.0
        %624 = vmatpush1.msra.mxu0 0.0
        %625 = vmatprep.subr.mxu0 0.0
        %626 = vmatpush1.msra.mxu0 0.0
        %627 = vmatprep.subr.mxu0 0.0
        %628 = vmatpush1.msra.mxu0 0.0
        %629 = vmatprep.subr.mxu0 0.0
        %630 = vmatpush1.msra.mxu0 0.0
        %631 = vmatprep.subr.mxu0 0.0
        %632 = vmatpush1.msra.mxu0 0.0
        %633 = vmatprep.subr.mxu0 0.0
        %634 = vmatpush1.msra.mxu0 0.0
        %635 = vmatprep.subr.mxu0 0.0
        %636 = vmatpush1.msra.mxu0 0.0
        %637 = vmatprep.subr.mxu0 0.0
        %638 = vmatpush1.msra.mxu0 0.0
        %639 = vmatprep.subr.mxu0 0.0
        %640 = vmatpush1.msra.mxu0 0.0
        %641 = vmatprep.subr.mxu0 0.0
        %642 = vmatpush1.msra.mxu0 0.0
        %643 = vmatprep.subr.mxu0 0.0
        %644 = vmatpush1.msra.mxu0 0.0
        %645 = vmatprep.subr.mxu0 0.0
        %646 = vmatpush1.msra.mxu0 0.0
        %647 = vmatprep.subr.mxu0 0.0
        %648 = vmatpush1.msra.mxu0 0.0
        %649 = vmatprep.subr.mxu0 0.0
        %650 = vmatpush1.msra.mxu0 0.0
        %651 = vmatprep.subr.mxu0 0.0
        %652 = vmatpush1.msra.mxu0 0.0
        %653 = vmatprep.subr.mxu0 0.0
        %654 = vmatpush1.msra.mxu0 0.0
        %655 = vmatprep.subr.mxu0 0.0
        %656 = vmatpush1.msra.mxu0 0.0
        %657 = vmatprep.subr.mxu0 0.0
        %658 = vmatpush1.msra.mxu0 0.0
        %659 = vmatprep.subr.mxu0 0.0
        %660 = vmatpush1.msra.mxu0 0.0
        %661 = vmatprep.subr.mxu0 0.0
        %662 = vmatpush1.msra.mxu0 0.0
        %663 = vmatprep.subr.mxu0 0.0
        %664 = vmatpush1.msra.mxu0 0.0
        %665 = vmatprep.mubr.f32.mxu0 0.0
        %v666 = vand.u32 %v262, 4294901760
        %667 = vmatmul.mubr.f32.gmra.mrb[0].mxu0 %v666
        %v668 = vpop.f32.mrb[0].mxu0
        %v669 = vadd.f32 %v587, %v668
        %v670 = vpop.f32.mrb[0].mxu0
        %671 = vmatprep.mubr.f32.mxu0 0.0
        %v672 = vand.u32 %v265, 4294901760
        %673 = vmatmul.mubr.f32.gmra.mrb[0].mxu0 %v672
        %v674 = vpop.f32.mrb[0].mxu0
        %v675 = vadd.f32 %v595, %v674
        %v676 = vpop.f32.mrb[0].mxu0
        %677 = vdwg.mxu0
        %678 = vmatprep.subr.mxu0 0.0
        %v679 = vand.u32 %v259, 4294901760
        %680 = vmatpush1.msra.mxu0 %v679
        %681 = vmatprep.subr.mxu0 0.0
        %682 = vmatpush1.msra.mxu0 0.0
        %683 = vmatprep.subr.mxu0 0.0
        %684 = vmatpush1.msra.mxu0 0.0
        %685 = vmatprep.subr.mxu0 0.0
        %686 = vmatpush1.msra.mxu0 0.0
        %687 = vmatprep.subr.mxu0 0.0
        %688 = vmatpush1.msra.mxu0 0.0
        %689 = vmatprep.subr.mxu0 0.0
        %690 = vmatpush1.msra.mxu0 0.0
        %691 = vmatprep.subr.mxu0 0.0
        %692 = vmatpush1.msra.mxu0 0.0
        %693 = vmatprep.subr.mxu0 0.0
        %694 = vmatpush1.msra.mxu0 0.0
        %695 = vmatprep.subr.mxu0 0.0
        %696 = vmatpush1.msra.mxu0 0.0
        %697 = vmatprep.subr.mxu0 0.0
        %698 = vmatpush1.msra.mxu0 0.0
        %699 = vmatprep.subr.mxu0 0.0
        %700 = vmatpush1.msra.mxu0 0.0
        %701 = vmatprep.subr.mxu0 0.0
        %702 = vmatpush1.msra.mxu0 0.0
        %703 = vmatprep.subr.mxu0 0.0
        %704 = vmatpush1.msra.mxu0 0.0
        %705 = vmatprep.subr.mxu0 0.0
        %706 = vmatpush1.msra.mxu0 0.0
        %707 = vmatprep.subr.mxu0 0.0
        %708 = vmatpush1.msra.mxu0 0.0
        %709 = vmatprep.subr.mxu0 0.0
        %710 = vmatpush1.msra.mxu0 0.0
        %711 = vmatprep.subr.mxu0 0.0
        %712 = vmatpush1.msra.mxu0 0.0
        %713 = vmatprep.subr.mxu0 0.0
        %714 = vmatpush1.msra.mxu0 0.0
        %715 = vmatprep.subr.mxu0 0.0
        %716 = vmatpush1.msra.mxu0 0.0
        %717 = vmatprep.subr.mxu0 0.0
        %718 = vmatpush1.msra.mxu0 0.0
        %719 = vmatprep.subr.mxu0 0.0
        %720 = vmatpush1.msra.mxu0 0.0
        %721 = vmatprep.subr.mxu0 0.0
        %722 = vmatpush1.msra.mxu0 0.0
        %723 = vmatprep.subr.mxu0 0.0
        %724 = vmatpush1.msra.mxu0 0.0
        %725 = vmatprep.subr.mxu0 0.0
        %726 = vmatpush1.msra.mxu0 0.0
        %727 = vmatprep.subr.mxu0 0.0
        %728 = vmatpush1.msra.mxu0 0.0
        %729 = vmatprep.subr.mxu0 0.0
        %730 = vmatpush1.msra.mxu0 0.0
        %731 = vmatprep.subr.mxu0 0.0
        %732 = vmatpush1.msra.mxu0 0.0
        %733 = vmatprep.subr.mxu0 0.0
        %734 = vmatpush1.msra.mxu0 0.0
        %735 = vmatprep.subr.mxu0 0.0
        %736 = vmatpush1.msra.mxu0 0.0
        %737 = vmatprep.subr.mxu0 0.0
        %738 = vmatpush1.msra.mxu0 0.0
        %739 = vmatprep.subr.mxu0 0.0
        %740 = vmatpush1.msra.mxu0 0.0
        %741 = vmatprep.subr.mxu0 0.0
        %742 = vmatpush1.msra.mxu0 0.0
        %743 = vmatprep.mubr.f32.mxu0 0.0
        %v744 = vand.u32 %v262, 4294901760
        %745 = vmatmul.mubr.f32.gmra.mrb[0].mxu0 %v744
        %v746 = vpop.f32.mrb[0].mxu0
        %v747 = vadd.f32 %v669, %v746
        %v748 = vpop.f32.mrb[0].mxu0
        %749 = vmatprep.mubr.f32.mxu0 0.0
        %v750 = vand.u32 %v265, 4294901760
        %751 = vmatmul.mubr.f32.gmra.mrb[0].mxu0 %v750
        %v752 = vpop.f32.mrb[0].mxu0
        %v753 = vadd.f32 %v675, %v752
        %v754 = vpop.f32.mrb[0].mxu0
        %755 = vdwg.mxu0
        %v756 = vmin.f32 %v257, %v747
        %v757 = vmin.f32 %v258, %v753
        %v758 = vmin.f32 %v747, %v753
        %v759 = vrot.slane %v758, 4
        %v760 = vmin.f32 %v758, %v759
        %v761 = vrot.slane %v760, 2
        %v762 = vmin.f32 %v760, %v761
        %v763 = vrot.slane %v762, 1
        %v764 = vmin.f32 %v762, %v763
        %765 = vst [vmem:[#allocation2] sm:$0xff] %v756
        %766 = vst [vmem:[#allocation2 + $0x8] sm:$0xff] %v757
        %s767 = scalar_lea.vmem %s225, %s28 [#allocation5]
        %v768 = vld [vmem:[%s767] sm:$0x1]
        %v769 = vmin.f32 %v768, %v764
        %770 = vst [vmem:[%s767] sm:$0x1] %v769
        // Predicated region
        $region37: #{tpu_custom_call.1} parent=27 // pred_check
          %p771 = pneg %p244
        $region38: #{tpu_custom_call.1} parent=27 // pred_check_branch
          %773 = sbr.rel (%p771) target = $region40
        $region39: #{tpu_custom_call.1} parent=27 // pred_region
          %v774 = vld [vmem:[#allocation2] sm:$0xff]
          %v775 = vld [vmem:[#allocation2 + $0x8] sm:$0xff]
          %776 = vxpose.xlu0.b32.start [1/16] %v774, 128
          %777 = vxpose.xlu0.b32.cont [2/16] %v775, 128
          %778 = vxpose.xlu0.b32.cont [3/16] 0.0, 128
          %779 = vxpose.xlu0.b32.cont [4/16] 0.0, 128
          %780 = vxpose.xlu0.b32.cont [5/16] 0.0, 128
          %781 = vxpose.xlu0.b32.cont [6/16] 0.0, 128
          %782 = vxpose.xlu0.b32.cont [7/16] 0.0, 128
          %783 = vxpose.xlu0.b32.cont [8/16] 0.0, 128
          %784 = vxpose.xlu0.b32.cont [9/16] 0.0, 128
          %785 = vxpose.xlu0.b32.cont [10/16] 0.0, 128
          %786 = vxpose.xlu0.b32.cont [11/16] 0.0, 128
          %787 = vxpose.xlu0.b32.cont [12/16] 0.0, 128
          %788 = vxpose.xlu0.b32.cont [13/16] 0.0, 128
          %789 = vxpose.xlu0.b32.cont [14/16] 0.0, 128
          %790 = vxpose.xlu0.b32.cont [15/16] 0.0, 128
          %791 = vxpose.xlu0.b32.end [16/16] 0.0, 128
          %v792 = vpop.trf.xlu0
          %v793 = vpop.trf.xlu0
          %v794 = vpop.trf.xlu0
          %v795 = vpop.trf.xlu0
          %v796 = vpop.trf.xlu0
          %v797 = vpop.trf.xlu0
          %v798 = vpop.trf.xlu0
          %v799 = vpop.trf.xlu0
          %v800 = vpop.trf.xlu0
          %v801 = vpop.trf.xlu0
          %v802 = vpop.trf.xlu0
          %v803 = vpop.trf.xlu0
          %v804 = vpop.trf.xlu0
          %v805 = vpop.trf.xlu0
          %v806 = vpop.trf.xlu0
          %v807 = vpop.trf.xlu0
          %vm808 = vcmask 130048
          %v809 = vsel %vm808, %v792, inf
          %v810 = vsel %vm808, %v793, inf
          %v811 = vsel %vm808, %v794, inf
          %v812 = vsel %vm808, %v795, inf
          %v813 = vsel %vm808, %v796, inf
          %v814 = vmin.f32 %v809, %v813
          %v815 = vsel %vm808, %v797, inf
          %v816 = vmin.f32 %v810, %v815
          %v817 = vsel %vm808, %v798, inf
          %v818 = vmin.f32 %v811, %v817
          %v819 = vsel %vm808, %v799, inf
          %v820 = vmin.f32 %v812, %v819
          %v821 = vsel %vm808, %v800, inf
          %v822 = vmin.f32 %v814, %v821
          %v823 = vsel %vm808, %v801, inf
          %v824 = vmin.f32 %v816, %v823
          %v825 = vsel %vm808, %v802, inf
          %v826 = vmin.f32 %v818, %v825
          %v827 = vsel %vm808, %v803, inf
          %v828 = vmin.f32 %v820, %v827
          %v829 = vsel %vm808, %v804, inf
          %v830 = vmin.f32 %v822, %v829
          %v831 = vsel %vm808, %v805, inf
          %v832 = vmin.f32 %v824, %v831
          %v833 = vsel %vm808, %v806, inf
          %v834 = vmin.f32 %v826, %v833
          %v835 = vsel %vm808, %v807, inf
          %v836 = vmin.f32 %v828, %v835
          %v837 = vmin.f32 %v830, %v832
          %v838 = vmin.f32 %v834, %v836
          %v839 = vmin.f32 %v837, %v838
          %v840 = vrot.slane %v839, 4
          %v841 = vmin.f32 %v839, %v840
          %v842 = vrot.slane %v841, 2
          %v843 = vmin.f32 %v841, %v842
          %v844 = vrot.slane %v843, 1
          %v845 = vmin.f32 %v843, %v844
          %v846 = vmax.f32 %v845, 0.0
          %v847 = vrsqrt.pop %v846
          %v848 = vmul.f32 %v846, %v847
          %vm849 = vcmp.eq.f32.partialorder %v846, inf
          %v850 = vsel %vm849, %v846, %v848
          %vm851 = vcmp.eq.f32.partialorder %v846, 0.0
          %v852 = vand.u32 %v846, 2147483648
          %v853 = vsel %vm851, %v852, %v850
          %vm854 = vcmask 122880
          %855 = vst.msk [vmem:[%s219] sm:$0x1] %vm854, %v853
        $region40: #{tpu_custom_call.1} parent=27 // pred_fallthru
          _
        // Predicated region
        $region41: #{tpu_custom_call.1} parent=27 // pred_check
          _
        $region42: #{tpu_custom_call.1} parent=27 // pred_check_branch
          %857 = sbr.rel (%p245) target = $region44
        $region43: #{tpu_custom_call.1} parent=27 // pred_region
          %v858 = vld [vmem:[%s225] sm:$0x1]
          %v859 = vmax.f32 %v858, 0.0
          %v860 = vrsqrt.pop %v859
          %v861 = vmul.f32 %v859, %v860
          %vm862 = vcmp.eq.f32.partialorder %v859, inf
          %v863 = vsel %vm862, %v859, %v861
          %vm864 = vcmp.eq.f32.partialorder %v859, 0.0
          %v865 = vand.u32 %v859, 2147483648
          %v866 = vsel %vm864, %v865, %v863
          %867 = vst [vmem:[%s225] sm:$0x1] %v866
        $region44: #{tpu_custom_call.1} parent=27 // pred_fallthru
          _
        %s868 = sand.u32 %s106, 1
        %s869 = scalar_lea.sflag [#allocation4], %s868
        %s870 = sand.u32 %s106, 1
        %s871 = scalar_lea.vmem [#allocation3], %s870
        %s872 = sand.u32 %s132, 1
        %s873 = scalar_lea.sflag [#allocation6], %s872
        %s874 = sand.u32 %s132, 1
        %s875 = scalar_lea.vmem [#allocation5], %s874
        // Predicated region
        $region45: #{tpu_custom_call.1} parent=27 // pred_check
          %p876 = pneg %p116
        $region46: #{tpu_custom_call.1} parent=27 // pred_check_branch
          %878 = sbr.rel (%p876) target = $region48
        $region47: #{tpu_custom_call.1} parent=27 // pred_region
          %s880 = ssub.s32 16, 16
          %881 = vsyncadd %s869, %s880
          %s882 = sadd.s32 %s27, %s26
          %s883 = smul.addr %s882, 16
          %s884 = scalar_lea.hbm %s2, %s883
          %s886 = sshll.u32 %s871, 4
          %s887 = int_to_ptr.vmem [resolvable:$true] %s886
          %889 = dma.vmem_to_hbm [thread:$0]  %s887, 16, %s884, %s869
        $region48: #{tpu_custom_call.1} parent=27 // pred_fallthru
          _
        // Predicated region
        $region49: #{tpu_custom_call.1} parent=27 // pred_check
          %p890 = pneg %p142
        $region50: #{tpu_custom_call.1} parent=27 // pred_check_branch
          %892 = sbr.rel (%p890) target = $region52
        $region51: #{tpu_custom_call.1} parent=27 // pred_region
          %s894 = ssub.s32 16, 16
          %895 = vsyncadd %s873, %s894
          %s896 = smul.addr %s26, 16
          %s897 = scalar_lea.hbm %s3, %s896
          %s899 = sshll.u32 %s875, 4
          %s900 = int_to_ptr.vmem [resolvable:$true] %s899
          %902 = dma.vmem_to_hbm [thread:$0]  %s900, 16, %s897, %s873
        $region52: #{tpu_custom_call.1} parent=27 // pred_fallthru
          _
      $region28: #{tpu_custom_call.1} parent=5 // pred_fallthru
        _
      %p903 = scmp.le.s32.totalorder 2, %s16
      // Predicated region
      $region53: #{tpu_custom_call.1} parent=5 // pred_check
        %p904 = pneg %p903
      $region54: #{tpu_custom_call.1} parent=5 // pred_check_branch
        %906 = sbr.rel (%p904) target = $region56
      $region55: #{tpu_custom_call.1} parent=5 // pred_region
        %s907 = ssub.s32 %s16, 2
        // Predicated region
        $region57: #{tpu_custom_call.1} parent=55 // pred_check
          %p908 = pneg %p122
        $region58: #{tpu_custom_call.1} parent=55 // pred_check_branch
          %910 = sbr.rel (%p908) target = $region60
        $region59: #{tpu_custom_call.1} parent=55 // pred_region
          %s911 = sand.u32 %s107, 1
          %s912 = scalar_lea.sflag [#allocation4], %s911
          %s913 = sand.u32 %s107, 1
          %s914 = scalar_lea.vmem [#allocation3], %s913
          %915 = dma.done %s912, 16
        $region60: #{tpu_custom_call.1} parent=55 // pred_fallthru
          _
        // Predicated region
        $region61: #{tpu_custom_call.1} parent=55 // pred_check
          %p916 = pneg %p148
        $region62: #{tpu_custom_call.1} parent=55 // pred_check_branch
          %918 = sbr.rel (%p916) target = $region64
        $region63: #{tpu_custom_call.1} parent=55 // pred_region
          %s919 = sand.u32 %s133, 1
          %s920 = scalar_lea.sflag [#allocation6], %s919
          %s921 = sand.u32 %s133, 1
          %s922 = scalar_lea.vmem [#allocation5], %s921
          %923 = dma.done %s920, 16
        $region64: #{tpu_custom_call.1} parent=55 // pred_fallthru
          _
      $region56: #{tpu_custom_call.1} parent=5 // pred_fallthru
        _
    $region6: #{tpu_custom_call.1} parent=1 // loop_footer
      %s20 = sadd.s32 1, %s16
    $region7: #{tpu_custom_call.1} parent=1 // loop_footer_branch
      %15 = sbr.rel target = $region3
    $region8: #{tpu_custom_call.1} parent=1 // loop_exit
      _
    %924 = vsyncpa [#allocation4], 1
    %s925 = scalar_lea.sflag [#allocation4], 1
    %926 = vsyncpa %s925, 1
    %927 = vsyncpa [#allocation6], 1
    %s928 = scalar_lea.sflag [#allocation6], 1
    %929 = vsyncpa %s928, 1

</llo_original>
